<compile_context>
chip_gen: v7x
topology: tpu7x:2x2x1
jax: 0.10.0
libtpu: 0.0.40
codegen_flags: <defaults>
</compile_context>

<pallas_src>
import jax
import jax.numpy as jnp
from jax.experimental import pallas as pl
from jax.experimental.pallas import tpu as pltpu


_LANE = 128
_SUBLANE = 8
_CHUNK = 2048  # rows per in-kernel compute chunk (keeps f32 temporaries small)


def _round_up(x, m):
    return (x + m - 1) // m * m


def _output_linear_kernel(x_ref, w_ref, b_ref, o_ref):
    """One row tile of sigmoid(x @ w.T + b), written lane-dense.

    x_ref: (tm, D)  VMEM  -- activation row tile (dominant HBM traffic)
    w_ref: (8, D)   VMEM  -- weight row in row 0, zero-padded to 8 sublanes
    b_ref: (1,)     SMEM  -- scalar bias
    o_ref: (1, tm)  VMEM  -- lane-dense output tile
    """
    tm = x_ref.shape[0]
    bias = b_ref[0].astype(jnp.float32)  # hoisted scalar read
    # Static (fully unrolled) chunking over rows: every offset is a Python int,
    # chunk starts are multiples of 2048 (sublane/lane aligned), so loads and
    # stores stay unmasked except possibly the tiny final chunk.
    for start in range(0, tm, _CHUNK):
        stop = min(start + _CHUNK, tm)
        xs = x_ref[start:stop, :]                       # (c, D)
        # Contract w (8, D) with x (c, D) along D -> (8, c) on the MXU (same
        # transposed-RHS pattern as q @ k.T); only row 0 is real.
        s = jax.lax.dot_general(
            w_ref[...],
            xs,
            dimension_numbers=(((1,), (1,)), ((), ())),
            preferred_element_type=jnp.float32,
        )
        o_ref[:, start:stop] = jax.nn.sigmoid(s[0:1, :] + bias).astype(o_ref.dtype)


def output_linears_forward(x, weight, bias, *, tm=None, vmem_limit_bytes=None):
    """Pallas equivalent of: sigmoid(Linear(d_model, 1)(x)).squeeze(2).

    x:      (B, S, D)   (f32 or bf16)
    weight: (1, D)      (PyTorch nn.Linear layout, out_dimension == 1)
    bias:   (1,)
    returns (B, S)
    """
    B, S, D = x.shape
    N = weight.shape[0]
    assert N == 1, "squeeze(2) semantics require out_dimension == 1"
    M = B * S
    itemsize = jnp.dtype(x.dtype).itemsize
    d_lanes = max(_round_up(D, _LANE), _LANE)      # VMEM lane-padded width
    row_bytes = d_lanes * itemsize                 # VMEM bytes per x row

    # --- generation-aware VMEM budget ------------------------------------
    try:
        vmem_cap = int(pltpu.get_tpu_info().vmem_capacity_bytes)
    except Exception:
        vmem_cap = 64 << 20                        # conservative: legal everywhere
    # Reserve ~16 MiB for the compiler; cap the request at 100 MiB (v5e/v6e
    # have 128 MiB, v7x has 64 MiB -> ~48 MiB budget there).
    vmem_budget = int(min(max(vmem_cap - (16 << 20), 32 << 20), 100 << 20))
    # Per-buffered x-tile budget (double-buffered), with slack for out/weight.
    x_tile_budget = min((vmem_budget - (4 << 20)) // 2, 32 << 20)

    # --- row-tile selection ------------------------------------------------
    tm_max = max(_LANE, (x_tile_budget // row_bytes) // _LANE * _LANE)
    if tm is None:
        if M <= tm_max:
            if M >= 2 * _LANE:
                # Ensure >= 2 grid steps so both v7x TensorCores get work.
                tm = min(tm_max, _round_up(pl.cdiv(M, 2), _LANE))
            else:
                # Tiny M: blocks exactly equal the arrays (no partial blocks).
                tm = M
        else:
            tm = tm_max
    else:
        tm = int(tm)
        if tm < M:
            tm = max(_LANE, (tm // _LANE) * _LANE)
        else:
            tm = M

    num_tiles = pl.cdiv(M, tm)
    m_pad = num_tiles * tm                         # output allocation width only

    x2d = x.reshape(M, D)                          # no pad / no extra HBM pass

    # Lane-dense weight row, zero-padded to 8 sublanes (tiny: 8*D elements).
    # Note: weight is cast to x.dtype before the matmul (bf16 x would differ
    # slightly from an f32-weight torch reference).
    w_row = jnp.zeros((8, D), dtype=x.dtype).at[0, :].set(weight[0].astype(x.dtype))
    b1 = bias.reshape(1).astype(jnp.float32)

    if vmem_limit_bytes is None:
        needed = (2 * tm * row_bytes                                   # x double-buffer
                  + 2 * _SUBLANE * _round_up(tm, _LANE) * itemsize     # out double-buffer
                  + 2 * _SUBLANE * d_lanes * itemsize                  # weight
                  + (4 << 20))                                         # headroom
        vmem_limit_bytes = int(min(max(needed, 32 << 20), vmem_budget))

    out = pl.pallas_call(
        _output_linear_kernel,
        out_shape=jax.ShapeDtypeStruct((1, m_pad), x.dtype),
        grid_spec=pltpu.PrefetchScalarGridSpec(
            num_scalar_prefetch=0,
            grid=(num_tiles,),
            in_specs=[
                pl.BlockSpec((tm, D), lambda i: (i, 0)),            # x row tile
                pl.BlockSpec((8, D), lambda i: (0, 0)),             # weight (resident)
                pl.BlockSpec(memory_space=pltpu.MemorySpace.SMEM),  # scalar bias
            ],
            out_specs=pl.BlockSpec((1, tm), lambda i: (0, i)),      # lane-dense out
        ),
        compiler_params=pltpu.CompilerParams(
            dimension_semantics=("parallel",),
            vmem_limit_bytes=vmem_limit_bytes,
        ),
        cost_estimate=pl.CostEstimate(
            flops=2 * M * D,
            transcendentals=M,
            bytes_accessed=M * D * itemsize + M * itemsize + 8 * D * itemsize + 4,
        ),
    )(x2d, w_row, b1)

    return out[0, :M].reshape(B, S)


if __name__ == "__main__":
    # Small shapes implied by the module: (batch, seq, d_model), out_dimension=1.
    B, S, D, N = 2, 8, 32, 1

    key = jax.random.PRNGKey(0)
    kx, kw, kb = jax.random.split(key, 3)

    x = jax.random.normal(kx, (B, S, D), dtype=jnp.float32)
    # Deterministic init matching nn.Linear's uniform(-1/sqrt(D), 1/sqrt(D)).
    bound = 1.0 / (D ** 0.5)
    weight = jax.random.uniform(kw, (N, D), minval=-bound, maxval=bound,
                                dtype=jnp.float32)
    bias = jax.random.uniform(kb, (N,), minval=-bound, maxval=bound,
                              dtype=jnp.float32)

    y = output_linears_forward(x, weight, bias)
    y = jax.block_until_ready(y)

    # Correctness check against a pure-JAX reference.
    ref = jax.nn.sigmoid(jnp.einsum("bsd,nd->bsn", x, weight) + bias)[..., 0]
    assert y.shape == (B, S)
    assert jnp.allclose(y, ref, atol=1e-5, rtol=1e-5)

    print("KERNEL_OK")
</pallas_src>

<mosaic_0001>
module attributes {stable_mosaic.version = 11 : i64} {
  func.func @_output_linear_kernel(%arg0: i32, %arg1: memref<16x32xf32, #tpu.memory_space<vmem>>, %arg2: memref<8x32xf32, #tpu.memory_space<vmem>>, %arg3: memref<1xf32, #tpu.memory_space<smem>>, %arg4: memref<1x16xf32, #tpu.memory_space<vmem>>) attributes {dimension_semantics = [#tpu.dimension_semantics<parallel>], iteration_bounds = array<i64: 1>, scalar_prefetch = 0 : i64, scratch_operands = 0 : i64, tpu.core_type = #tpu.core_type<tc>, window_params = [{transform_indices = @transform_0, window_bounds = array<i64: 16, 32>}, {pipeline_mode = #tpu.pipeline_mode<synchronous>, transform_indices = @transform_1, window_bounds = array<i64: 8, 32>}, {transform_indices = @transform_2, window_bounds = array<i64: 1>}, {transform_indices = @transform_3, window_bounds = array<i64: 1, 16>}]} {
    %c0 = arith.constant 0 : index
    %0 = memref.load %arg3[%c0] : memref<1xf32, #tpu.memory_space<smem>>
    %c0_0 = arith.constant 0 : index
    %c0_1 = arith.constant 0 : index
    %1 = vector.load %arg1[%c0_0, %c0_1] : memref<16x32xf32, #tpu.memory_space<vmem>>, vector<16x32xf32>
    %c0_2 = arith.constant 0 : index
    %c0_3 = arith.constant 0 : index
    %2 = vector.load %arg2[%c0_2, %c0_3] : memref<8x32xf32, #tpu.memory_space<vmem>>, vector<8x32xf32>
    %cst = arith.constant dense<0.000000e+00> : vector<8x16xf32>
    %3 = tpu.matmul %2, %1, %cst {dimension_numbers = #tpu.dot_dimension_numbers<[1], [1], [0], [0], [0, 0, 1, 0], [], []>} : vector<8x32xf32>, vector<16x32xf32>, vector<8x16xf32> -> vector<8x16xf32>
    %4 = vector.extract_strided_slice %3 {offsets = [0, 0], sizes = [1, 16], strides = [1, 1]} : vector<8x16xf32> to vector<1x16xf32>
    %5 = vector.broadcast %0 : f32 to vector<1x16xf32>
    %6 = arith.addf %4, %5 : vector<1x16xf32>
    %7 = arith.negf %6 : vector<1x16xf32>
    %8 = math.exp %7 : vector<1x16xf32>
    %cst_4 = arith.constant 1.000000e+00 : f32
    %9 = vector.broadcast %cst_4 : f32 to vector<1x16xf32>
    %10 = arith.addf %9, %8 : vector<1x16xf32>
    %11 = arith.divf %9, %10 : vector<1x16xf32>
    %c0_5 = arith.constant 0 : index
    %c0_6 = arith.constant 0 : index
    %12 = vector.load %arg4[%c0_5, %c0_6] : memref<1x16xf32, #tpu.memory_space<vmem>>, vector<1x16xf32>
    tpu.vector_store %arg4[%c0_5, %c0_6], %11 {strides = array<i32>} : memref<1x16xf32, #tpu.memory_space<vmem>>, vector<1x16xf32>,
    return
  }
  func.func @transform_0(%arg0: i32) -> (i32, i32) {
    %c0_i32 = arith.constant 0 : i32
    %c0_i32_0 = arith.constant 0 : i32
    return %arg0, %c0_i32 : i32, i32
  }
  func.func @transform_1(%arg0: i32) -> (i32, i32) {
    %c0_i32 = arith.constant 0 : i32
    %c0_i32_0 = arith.constant 0 : i32
    %c0_i32_1 = arith.constant 0 : i32
    return %c0_i32, %c0_i32_0 : i32, i32
  }
  func.func @transform_2(%arg0: i32) -> i32 {
    %c0_i32 = arith.constant 0 : i32
    %c0_i32_0 = arith.constant 0 : i32
    return %c0_i32 : i32
  }
  func.func @transform_3(%arg0: i32) -> (i32, i32) {
    %c0_i32 = arith.constant 0 : i32
    %c0_i32_0 = arith.constant 0 : i32
    return %c0_i32, %arg0 : i32, i32
  }
}

</mosaic_0001>

<llo_original>
// kernel: tpu_custom_call.1
$region0: #{tpu_custom_call.1}
  #allocation0 [shape = 'u32[]', space=smem, size = 0x4, offset = 0x4, fixed_abs, tag = 'smem constant byte address 0x4 - core index']
  #allocation1 [shape = 'u32[144,128]{1,0:T(1,128)}', space=vmem, size = 0x12000, scoped, tag = 'internal scratch']
  #allocation2 [shape = 'f32[1]{0:T(128)S(6)}', space=smem, size = 0x200, scoped, tag = 'scoped memory for tpu_custom_call.1']
  %s0 = inlined_call_operand.hbm [shape: f32[16,32], index: 0, kind: input, shape index: {}]
  %s1 = inlined_call_operand.hbm [shape: f32[8,32], index: 1, kind: input, shape index: {}]
  %s2 = inlined_call_operand.<no memory space> [shape: f32[1], index: 2, kind: input, shape index: {}]
  %s3 = inlined_call_operand.hbm [shape: f32[1,16], index: 3, kind: output, shape index: {}]
  %s4 = sld [smem:[#allocation0]]
  $region30: #{tpu_custom_call.1} parent=0
    _
  %s6 = ssub.s32 1, %s4
  %s7 = scalar_select 0, %s6, %s4
  %8 = sst [smem:[#allocation2]] %s2
  $region1: #{tpu_custom_call.1} parent=0
    #allocation3 [shape = 'u8[8192]{0}', space=vmem, size = 0x2000, scoped, tag = 'input window, operand 0, single buffered']
    #allocation4 [shape = 's32[1]{0}', space=sflag, size = 0x4, scoped, tag = 'scoped memory for tpu_custom_call.1']
    #allocation5 [shape = 's32[1]{0}', space=sflag, size = 0x4, scoped, tag = 'scoped memory for tpu_custom_call.1']
    #allocation6 [shape = 'u8[4096]{0}', space=vmem, size = 0x1000, scoped, tag = 'input window, operand 1, single buffered']
    #allocation7 [shape = 's32[1]{0}', space=sflag, size = 0x4, scoped, tag = 'scoped memory for tpu_custom_call.1']
    #allocation8 [shape = 'u8[512]{0}', space=vmem, size = 0x400, scoped, tag = 'output window, operand 0, single buffered']
    %9 = vsyncpa [#allocation4], 0
    %10 = vsyncpa [#allocation7], 0
    %11 = vsyncpa [#allocation5], 0
    // Predicated region
    $region2: #{tpu_custom_call.1} parent=1 // pred_check
      _
    $region3: #{tpu_custom_call.1} parent=1 // pred_check_branch
      %13 = sbr.rel (0) target = $region5
    $region4: #{tpu_custom_call.1} parent=1 // pred_region
      %s15 = ssub.s32 256, 256
      %16 = vsyncadd [#allocation4], %s15
      %s17 = sshll.u32 [#allocation3], 4
      %s18 = int_to_ptr.vmem [resolvable:$true] %s17
      %23 = dma.hbm_to_vmem [thread:$0]  %s0, 256, %s18, [#allocation4], 128, 128, 8
    $region5: #{tpu_custom_call.1} parent=1 // pred_fallthru
      _
    // Predicated region
    $region6: #{tpu_custom_call.1} parent=1 // pred_check
      _
    $region7: #{tpu_custom_call.1} parent=1 // pred_check_branch
      %25 = sbr.rel (0) target = $region9
    $region8: #{tpu_custom_call.1} parent=1 // pred_region
      %s27 = ssub.s32 128, 128
      %28 = vsyncadd [#allocation7], %s27
      %s30 = sshll.u32 [#allocation6], 4
      %s31 = int_to_ptr.vmem [resolvable:$true] %s30
      %33 = dma.hbm_to_vmem [thread:$0]  %s1, 128, %s31, [#allocation7]
    $region9: #{tpu_custom_call.1} parent=1 // pred_fallthru
      _
    // Predicated region
    $region10: #{tpu_custom_call.1} parent=1 // pred_check
      _
    $region11: #{tpu_custom_call.1} parent=1 // pred_check_branch
      %35 = sbr.rel (0) target = $region13
    $region12: #{tpu_custom_call.1} parent=1 // pred_region
      _
    $region13: #{tpu_custom_call.1} parent=1 // pred_fallthru
      _
    // Predicated region
    $region14: #{tpu_custom_call.1} parent=1 // pred_check
      _
    $region15: #{tpu_custom_call.1} parent=1 // pred_check_branch
      %37 = sbr.rel (0) target = $region17
    $region16: #{tpu_custom_call.1} parent=1 // pred_region
      %38 = dma.done [#allocation4], 256
    $region17: #{tpu_custom_call.1} parent=1 // pred_fallthru
      _
    // Predicated region
    $region18: #{tpu_custom_call.1} parent=1 // pred_check
      _
    $region19: #{tpu_custom_call.1} parent=1 // pred_check_branch
      %40 = sbr.rel (0) target = $region21
    $region20: #{tpu_custom_call.1} parent=1 // pred_region
      %41 = dma.done [#allocation7], 128
    $region21: #{tpu_custom_call.1} parent=1 // pred_fallthru
      _
    %s42 = sld [smem:[#allocation2]]
    %v43 = vld [vmem:[#allocation3] sm:$0xff]
    %v44 = vld [vmem:[#allocation3 + $0x8] sm:$0xff]
    %v45 = vld [vmem:[#allocation6] sm:$0xff]
    %vm46 = vcmask 261120
    %v48 = vsel %vm46, %v45, 0
    %v51 = vsel %vm46, %v43, 0
    %v54 = vsel %vm46, %v44, 0
    %56 = vmatprep.subr.mxu0 0.0
    %57 = vmatpush1.xpose.msra.mxu0 %v51
    %58 = vmatprep.subr.mxu0 0.0
    %59 = vmatpush1.xpose.msra.mxu0 %v54
    %60 = vmatprep.subr.mxu0 0.0
    %61 = vmatpush1.xpose.msra.mxu0 0.0
    %62 = vmatprep.subr.mxu0 0.0
    %63 = vmatpush1.xpose.msra.mxu0 0.0
    %64 = vmatprep.subr.mxu0 0.0
    %65 = vmatpush1.xpose.msra.mxu0 0.0
    %66 = vmatprep.subr.mxu0 0.0
    %67 = vmatpush1.xpose.msra.mxu0 0.0
    %68 = vmatprep.subr.mxu0 0.0
    %69 = vmatpush1.xpose.msra.mxu0 0.0
    %70 = vmatprep.subr.mxu0 0.0
    %71 = vmatpush1.xpose.msra.mxu0 0.0
    %72 = vmatprep.subr.mxu0 0.0
    %73 = vmatpush1.xpose.msra.mxu0 0.0
    %74 = vmatprep.subr.mxu0 0.0
    %75 = vmatpush1.xpose.msra.mxu0 0.0
    %76 = vmatprep.subr.mxu0 0.0
    %77 = vmatpush1.xpose.msra.mxu0 0.0
    %78 = vmatprep.subr.mxu0 0.0
    %79 = vmatpush1.xpose.msra.mxu0 0.0
    %80 = vmatprep.subr.mxu0 0.0
    %81 = vmatpush1.xpose.msra.mxu0 0.0
    %82 = vmatprep.subr.mxu0 0.0
    %83 = vmatpush1.xpose.msra.mxu0 0.0
    %84 = vmatprep.subr.mxu0 0.0
    %85 = vmatpush1.xpose.msra.mxu0 0.0
    %86 = vmatprep.subr.mxu0 0.0
    %87 = vmatpush1.xpose.msra.mxu0 0.0
    %88 = vmatprep.subr.mxu0 0.0
    %89 = vmatpush1.xpose.msra.mxu0 0.0
    %90 = vmatprep.subr.mxu0 0.0
    %91 = vmatpush1.xpose.msra.mxu0 0.0
    %92 = vmatprep.subr.mxu0 0.0
    %93 = vmatpush1.xpose.msra.mxu0 0.0
    %94 = vmatprep.subr.mxu0 0.0
    %95 = vmatpush1.xpose.msra.mxu0 0.0
    %96 = vmatprep.subr.mxu0 0.0
    %97 = vmatpush1.xpose.msra.mxu0 0.0
    %98 = vmatprep.subr.mxu0 0.0
    %99 = vmatpush1.xpose.msra.mxu0 0.0
    %100 = vmatprep.subr.mxu0 0.0
    %101 = vmatpush1.xpose.msra.mxu0 0.0
    %102 = vmatprep.subr.mxu0 0.0
    %103 = vmatpush1.xpose.msra.mxu0 0.0
    %104 = vmatprep.subr.mxu0 0.0
    %105 = vmatpush1.xpose.msra.mxu0 0.0
    %106 = vmatprep.subr.mxu0 0.0
    %107 = vmatpush1.xpose.msra.mxu0 0.0
    %108 = vmatprep.subr.mxu0 0.0
    %109 = vmatpush1.xpose.msra.mxu0 0.0
    %110 = vmatprep.subr.mxu0 0.0
    %111 = vmatpush1.xpose.msra.mxu0 0.0
    %112 = vmatprep.subr.mxu0 0.0
    %113 = vmatpush1.xpose.msra.mxu0 0.0
    %114 = vmatprep.subr.mxu0 0.0
    %115 = vmatpush1.xpose.msra.mxu0 0.0
    %116 = vmatprep.subr.mxu0 0.0
    %117 = vmatpush1.xpose.msra.mxu0 0.0
    %118 = vmatprep.subr.mxu0 0.0
    %119 = vmatpush1.xpose.msra.mxu0 0.0
    %120 = vmatprep.mubr.f32.mxu0 0.0
    %121 = vmatmul.mubr.f32.gmra.mrb[0].mxu0 %v48
    %v122 = vpop.f32.mrb[0].mxu0
    %v123 = vadd.f32 0.0, %v122
    %v124 = vpop.f32.mrb[0].mxu0
    %125 = vdwg.mxu0
    %v126 = vstv %s42
    %v127 = vadd.f32 %v123, %v126
    %v128 = vxor.u32 %v127, 2147483648
    %v129 = vmul.f32 %v128, 1.442695
    %v130 = vpow.pop %v129
    %v131 = vadd.f32 %v130, 1.0
    %v132 = vrcp.pop %v131
    %v133 = vmul.f32 1.0, %v132
    %vm134 = vcmask 122880
    %135 = vst.msk [vmem:[#allocation8] sm:$0x1] %vm134, %v133
    // Predicated region
    $region22: #{tpu_custom_call.1} parent=1 // pred_check
      _
    $region23: #{tpu_custom_call.1} parent=1 // pred_check_branch
      %137 = sbr.rel (0) target = $region25
    $region24: #{tpu_custom_call.1} parent=1 // pred_region
      %s139 = ssub.s32 16, 16
      %140 = vsyncadd [#allocation5], %s139
      %s142 = sshll.u32 [#allocation8], 4
      %s143 = int_to_ptr.vmem [resolvable:$true] %s142
      %145 = dma.vmem_to_hbm [thread:$0]  %s143, 16, %s3, [#allocation5]
    $region25: #{tpu_custom_call.1} parent=1 // pred_fallthru
      _
    // Predicated region
    $region26: #{tpu_custom_call.1} parent=1 // pred_check
      _
    $region27: #{tpu_custom_call.1} parent=1 // pred_check_branch
      %147 = sbr.rel (0) target = $region29
    $region28: #{tpu_custom_call.1} parent=1 // pred_region
      %148 = dma.done [#allocation5], 16
    $region29: #{tpu_custom_call.1} parent=1 // pred_fallthru
      _
    %149 = vsyncpa [#allocation4], 1
    %150 = vsyncpa [#allocation7], 1
    %151 = vsyncpa [#allocation5], 1

</llo_original>
